<compile_context>
chip_gen: v6e
topology: v6e:2x2x1
jax: 0.10.0
libtpu: 0.0.40
codegen_flags: <defaults>
</compile_context>

<pallas_src>
import jax
import jax.numpy as jnp
from jax import lax
from jax.experimental import pallas as pl
from jax.experimental.pallas import tpu as pltpu

# ----------------------------- config ---------------------------------------
B = 2          # batch
T = 16         # time steps
C_IN = 64      # in_channels
C_CONV = 128   # conv_channels
K = 3          # depthwise kernel size
DIL = 1        # dilation
PAD = DIL * (K - 1) // 2   # non-causal 'same' padding
LN_EPS = 1e-5              # nn.LayerNorm default eps

# rows of the packed per-channel parameter matrix (shape (6 + K, C_CONV))
ROW_B1, ROW_G1, ROW_BE1, ROW_BD, ROW_G2, ROW_BE2, ROW_WD = 0, 1, 2, 3, 4, 5, 6


# ----------------------------- Pallas kernel ---------------------------------
def _ln_single_pass(y, gamma, beta):
    """LayerNorm over channels (last axis), biased variance, one pass."""
    inv_c = 1.0 / y.shape[-1]
    s1 = jnp.sum(y, axis=-1, keepdims=True)
    s2 = jnp.sum(y * y, axis=-1, keepdims=True)
    mean = s1 * inv_c
    var = jnp.maximum(s2 * inv_c - mean * mean, 0.0)
    return (y - mean) * lax.rsqrt(var + LN_EPS) * gamma + beta


def conv1d_block_kernel(x_ref, w1_ref, ws_ref, pv_ref, bs_ref, alpha_ref, o_ref):
    row = lambda r: pv_ref[r:r + 1, :]          # (1, C_CONV) packed-param row

    x = x_ref[...]                              # (B*T, C_IN) f32, kept for residual

    # ---- conv1x1 (pointwise): bf16 operands on the MXU, f32 accumulate ------
    y = jnp.dot(x.astype(jnp.bfloat16), w1_ref[...],
                preferred_element_type=jnp.float32) + row(ROW_B1)

    # ---- PReLU 1 (alpha is an SMEM scalar) -----------------------------------
    a1 = alpha_ref[0]
    y = jnp.where(y >= 0, y, a1 * y)

    # ---- ChannelWiseLayerNorm 1 ----------------------------------------------
    y = _ln_single_pass(y, row(ROW_G1), row(ROW_BE1))

    # ---- depthwise conv over time (k=3, dil=1, 'same'), all in vregs ---------
    # rows are (batch*time); shifted taps built by concatenating a zero row,
    # then boundary rows masked so taps never leak across the batch boundary.
    ridx = lax.broadcasted_iota(jnp.int32, (B * T, 1), 0)
    zrow = jnp.zeros((1, C_CONV), jnp.float32)
    t_prev = jnp.concatenate([zrow, y[:-1, :]], axis=0)       # y[t-1]
    t_prev = jnp.where(ridx % T == 0, 0.0, t_prev)            # zero at t == 0
    t_next = jnp.concatenate([y[1:, :], zrow], axis=0)        # y[t+1]
    t_next = jnp.where(ridx % T == T - 1, 0.0, t_next)        # zero at t == T-1
    y = (t_prev * row(ROW_WD + 0)
         + y * row(ROW_WD + 1)
         + t_next * row(ROW_WD + 2)
         + row(ROW_BD))

    # ---- PReLU 2 --------------------------------------------------------------
    a2 = alpha_ref[1]
    y = jnp.where(y >= 0, y, a2 * y)

    # ---- ChannelWiseLayerNorm 2 -----------------------------------------------
    y = _ln_single_pass(y, row(ROW_G2), row(ROW_BE2))

    # ---- sconv (pointwise back to C_IN) + bias + residual ----------------------
    y = jnp.dot(y.astype(jnp.bfloat16), ws_ref[...],
                preferred_element_type=jnp.float32) + bs_ref[...]
    o_ref[...] = x + y


# ----------------------------- wrapper ---------------------------------------
@jax.jit
def conv1d_block(x_ncl, params):
    """x_ncl: (B, C_IN, T) float32, matching the PyTorch Conv1d layout."""
    (w1, b1, a1, g1, be1, wd, bd, a2, g2, be2, ws, bs) = params

    # pack the six (1, C_CONV) vectors + K depthwise rows into one array, and the
    # two PReLU alphas into a tiny SMEM-resident array.
    pvec = jnp.concatenate([b1, g1, be1, bd, g2, be2, wd], axis=0)  # (6+K, C_CONV)
    alphas = jnp.stack([a1.reshape(()), a2.reshape(())])            # (2,)

    # NCL -> (B*T, C_IN): one fused XLA transpose+reshape outside the kernel.
    x2d = jnp.transpose(x_ncl, (0, 2, 1)).reshape(B * T, C_IN)

    vmem = pl.BlockSpec(memory_space=pltpu.MemorySpace.VMEM)
    out2d = pl.pallas_call(
        conv1d_block_kernel,
        out_shape=jax.ShapeDtypeStruct((B * T, C_IN), jnp.float32),
        in_specs=[
            vmem,                                               # x2d
            vmem,                                               # w1 (bf16)
            vmem,                                               # ws (bf16)
            vmem,                                               # packed per-channel params
            vmem,                                               # bs
            pl.BlockSpec(memory_space=pltpu.MemorySpace.SMEM),  # PReLU alphas
        ],
        out_specs=vmem,
    )(x2d, w1.astype(jnp.bfloat16), ws.astype(jnp.bfloat16), pvec, bs, alphas)

    return jnp.transpose(out2d.reshape(B, T, C_IN), (0, 2, 1))     # back to (B, C_IN, T)


# ----------------------------- pure-JAX reference -----------------------------
def _layer_norm_ref(y, gamma, beta):
    mean = jnp.mean(y, axis=-1, keepdims=True)
    var = jnp.mean((y - mean) ** 2, axis=-1, keepdims=True)
    return (y - mean) * lax.rsqrt(var + LN_EPS) * gamma + beta


def reference_forward(x_ncl, params):
    (w1, b1, a1, g1, be1, wd, bd, a2, g2, be2, ws, bs) = params
    x = jnp.transpose(x_ncl, (0, 2, 1))                      # (B, T, C_IN)
    y = jnp.einsum("btc,cd->btd", x, w1) + b1
    y = jnp.where(y >= 0, y, a1[0, 0] * y)
    y = _layer_norm_ref(y, g1, be1)
    yp = jnp.pad(y, ((0, 0), (PAD, PAD), (0, 0)))
    y = sum(yp[:, k * DIL:k * DIL + T, :] * wd[k] for k in range(K)) + bd
    y = jnp.where(y >= 0, y, a2[0, 0] * y)
    y = _layer_norm_ref(y, g2, be2)
    y = jnp.einsum("btd,dc->btc", y, ws) + bs
    return jnp.transpose(x + y, (0, 2, 1))


# ----------------------------- parameter init ---------------------------------
def init_params(key):
    ks = jax.random.split(key, 8)
    w1 = 0.1 * jax.random.normal(ks[0], (C_IN, C_CONV), jnp.float32)
    b1 = 0.1 * jax.random.normal(ks[1], (1, C_CONV), jnp.float32)
    a1 = jnp.full((1, 1), 0.25, jnp.float32)                  # PReLU default init
    g1 = 1.0 + 0.1 * jax.random.normal(ks[2], (1, C_CONV), jnp.float32)
    be1 = 0.1 * jax.random.normal(ks[3], (1, C_CONV), jnp.float32)
    wd = 0.3 * jax.random.normal(ks[4], (K, C_CONV), jnp.float32)  # depthwise (K, C)
    bd = 0.1 * jax.random.normal(ks[5], (1, C_CONV), jnp.float32)
    a2 = jnp.full((1, 1), 0.25, jnp.float32)
    g2 = 1.0 + 0.1 * jax.random.normal(ks[6], (1, C_CONV), jnp.float32)
    be2 = 0.1 * jax.random.normal(ks[7], (1, C_CONV), jnp.float32)
    ws = 0.1 * jax.random.normal(jax.random.fold_in(key, 99), (C_CONV, C_IN), jnp.float32)
    bs = 0.1 * jax.random.normal(jax.random.fold_in(key, 100), (1, C_IN), jnp.float32)
    return (w1, b1, a1, g1, be1, wd, bd, a2, g2, be2, ws, bs)


# ----------------------------- main -------------------------------------------
if __name__ == "__main__":
    key = jax.random.PRNGKey(0)
    kx, kp = jax.random.split(key)
    x = jax.random.normal(kx, (B, C_IN, T), jnp.float32)      # PyTorch NCL layout
    params = init_params(kp)

    out = jax.block_until_ready(conv1d_block(x, params))
    ref = reference_forward(x, params)

    assert out.shape == (B, C_IN, T)
    assert jnp.allclose(out, ref, rtol=2e-2, atol=2e-2), "mismatch vs reference"

    print("KERNEL_OK")
</pallas_src>

<mosaic_0001>
module attributes {stable_mosaic.version = 11 : i64} {
  func.func @conv1d_block_kernel(%arg0: memref<32x64xf32, #tpu.memory_space<vmem>>, %arg1: memref<64x128xbf16, #tpu.memory_space<vmem>>, %arg2: memref<128x64xbf16, #tpu.memory_space<vmem>>, %arg3: memref<9x128xf32, #tpu.memory_space<vmem>>, %arg4: memref<1x64xf32, #tpu.memory_space<vmem>>, %arg5: memref<2xf32, #tpu.memory_space<smem>>, %arg6: memref<32x64xf32, #tpu.memory_space<vmem>>) attributes {dimension_semantics = [], scalar_prefetch = 0 : i64, scratch_operands = 0 : i64, tpu.core_type = #tpu.core_type<tc>} {
    %c0 = arith.constant 0 : index
    %c0_0 = arith.constant 0 : index
    %0 = vector.load %arg0[%c0, %c0_0] : memref<32x64xf32, #tpu.memory_space<vmem>>, vector<32x64xf32>
    %1 = arith.truncf %0 : vector<32x64xf32> to vector<32x64xbf16>
    %c0_1 = arith.constant 0 : index
    %c0_2 = arith.constant 0 : index
    %2 = vector.load %arg1[%c0_1, %c0_2] : memref<64x128xbf16, #tpu.memory_space<vmem>>, vector<64x128xbf16>
    %cst = arith.constant dense<0.000000e+00> : vector<32x128xf32>
    %3 = tpu.matmul %1, %2, %cst {dimension_numbers = #tpu.dot_dimension_numbers<[1], [0], [0], [1], [0, 0, 1, 1], [], []>} : vector<32x64xbf16>, vector<64x128xbf16>, vector<32x128xf32> -> vector<32x128xf32>
    %c0_3 = arith.constant 0 : index
    %c0_4 = arith.constant 0 : index
    %4 = vector.load %arg3[%c0_3, %c0_4] : memref<9x128xf32, #tpu.memory_space<vmem>>, vector<1x128xf32>
    %5 = vector.broadcast %4 : vector<1x128xf32> to vector<32x128xf32>
    %6 = arith.addf %3, %5 : vector<32x128xf32>
    %c0_5 = arith.constant 0 : index
    %7 = memref.load %arg5[%c0_5] : memref<2xf32, #tpu.memory_space<smem>>
    %cst_6 = arith.constant 0.000000e+00 : f32
    %8 = vector.broadcast %cst_6 : f32 to vector<32x128xf32>
    %9 = arith.cmpf oge, %6, %8 : vector<32x128xf32>
    %10 = vector.broadcast %7 : f32 to vector<32x128xf32>
    %11 = arith.mulf %10, %6 : vector<32x128xf32>
    %12 = arith.select %9, %6, %11 : vector<32x128xi1>, vector<32x128xf32>
    %c1 = arith.constant 1 : index
    %c0_7 = arith.constant 0 : index
    %13 = vector.load %arg3[%c1, %c0_7] : memref<9x128xf32, #tpu.memory_space<vmem>>, vector<1x128xf32>
    %c2 = arith.constant 2 : index
    %c0_8 = arith.constant 0 : index
    %14 = vector.load %arg3[%c2, %c0_8] : memref<9x128xf32, #tpu.memory_space<vmem>>, vector<1x128xf32>
    %cst_9 = arith.constant dense<0.000000e+00> : vector<32xf32>
    %15 = vector.multi_reduction <add>, %12, %cst_9 [1] : vector<32x128xf32> to vector<32xf32>
    %16 = vector.shape_cast %15 : vector<32xf32> to vector<32x1xf32>
    %17 = arith.mulf %12, %12 : vector<32x128xf32>
    %cst_10 = arith.constant dense<0.000000e+00> : vector<32xf32>
    %18 = vector.multi_reduction <add>, %17, %cst_10 [1] : vector<32x128xf32> to vector<32xf32>
    %19 = vector.shape_cast %18 : vector<32xf32> to vector<32x1xf32>
    %cst_11 = arith.constant 7.812500e-03 : f32
    %20 = vector.broadcast %cst_11 : f32 to vector<32x1xf32>
    %21 = arith.mulf %16, %20 : vector<32x1xf32>
    %cst_12 = arith.constant 7.812500e-03 : f32
    %22 = vector.broadcast %cst_12 : f32 to vector<32x1xf32>
    %23 = arith.mulf %19, %22 : vector<32x1xf32>
    %24 = arith.mulf %21, %21 : vector<32x1xf32>
    %25 = arith.subf %23, %24 : vector<32x1xf32>
    %cst_13 = arith.constant 0.000000e+00 : f32
    %26 = vector.broadcast %cst_13 : f32 to vector<32x1xf32>
    %27 = arith.maximumf %25, %26 : vector<32x1xf32>
    %28 = vector.broadcast %21 : vector<32x1xf32> to vector<32x128xf32>
    %29 = arith.subf %12, %28 : vector<32x128xf32>
    %cst_14 = arith.constant 9.99999974E-6 : f32
    %30 = vector.broadcast %cst_14 : f32 to vector<32x1xf32>
    %31 = arith.addf %27, %30 : vector<32x1xf32>
    %32 = math.rsqrt %31 : vector<32x1xf32>
    %33 = vector.broadcast %32 : vector<32x1xf32> to vector<32x128xf32>
    %34 = arith.mulf %29, %33 : vector<32x128xf32>
    %35 = vector.broadcast %13 : vector<1x128xf32> to vector<32x128xf32>
    %36 = arith.mulf %34, %35 : vector<32x128xf32>
    %37 = vector.broadcast %14 : vector<1x128xf32> to vector<32x128xf32>
    %38 = arith.addf %36, %37 : vector<32x128xf32>
    %39 = tpu.iota {dimensions = array<i32: 0>} : vector<32x1xi32>
    %cst_15 = arith.constant 0.000000e+00 : f32
    %40 = vector.broadcast %cst_15 : f32 to vector<1x128xf32>
    %41 = vector.extract_strided_slice %38 {offsets = [0, 0], sizes = [31, 128], strides = [1, 1]} : vector<32x128xf32> to vector<31x128xf32>
    %42 = tpu.concatenate %40, %41 in 0 : vector<1x128xf32>, vector<31x128xf32> -> vector<32x128xf32>
    %c16_i32 = arith.constant 16 : i32
    %c0_i32 = arith.constant 0 : i32
    %43 = arith.cmpi eq, %c16_i32, %c0_i32 : i32
    %c1_i32 = arith.constant 1 : i32
    %44 = arith.select %43, %c1_i32, %c16_i32 : i32
    %45 = vector.broadcast %44 : i32 to vector<32x1xi32>
    %46 = arith.remsi %39, %45 : vector<32x1xi32>
    %c0_i32_16 = arith.constant 0 : i32
    %47 = vector.broadcast %c0_i32_16 : i32 to vector<32x1xi32>
    %48 = arith.cmpi ne, %46, %47 : vector<32x1xi32>
    %c0_i32_17 = arith.constant 0 : i32
    %49 = vector.broadcast %c0_i32_17 : i32 to vector<32x1xi32>
    %50 = arith.cmpi slt, %46, %49 : vector<32x1xi32>
    %c0_i32_18 = arith.constant 0 : i32
    %51 = arith.cmpi slt, %44, %c0_i32_18 : i32
    %52 = vector.broadcast %51 : i1 to vector<32x1xi1>
    %53 = vector.broadcast %52 : vector<32x1xi1> to vector<32x1xi1>
    %54 = arith.xori %50, %53 : vector<32x1xi1>
    %55 = arith.andi %54, %48 : vector<32x1xi1>
    %56 = vector.broadcast %44 : i32 to vector<32x1xi32>
    %57 = arith.addi %46, %56 : vector<32x1xi32>
    %58 = arith.select %55, %57, %46 : vector<32x1xi1>, vector<32x1xi32>
    %c0_i32_19 = arith.constant 0 : i32
    %59 = vector.broadcast %c0_i32_19 : i32 to vector<32x1xi32>
    %60 = arith.cmpi eq, %58, %59 : vector<32x1xi32>
    %cst_20 = arith.constant 0.000000e+00 : f32
    %61 = vector.shape_cast %60 : vector<32x1xi1> to vector<32x1xi1>
    %62 = vector.broadcast %61 : vector<32x1xi1> to vector<32x128xi1>
    %63 = vector.broadcast %cst_20 : f32 to vector<32x128xf32>
    %64 = arith.select %62, %63, %42 : vector<32x128xi1>, vector<32x128xf32>
    %65 = vector.extract_strided_slice %38 {offsets = [1, 0], sizes = [31, 128], strides = [1, 1]} : vector<32x128xf32> to vector<31x128xf32>
    %66 = tpu.concatenate %65, %40 in 0 : vector<31x128xf32>, vector<1x128xf32> -> vector<32x128xf32>
    %c16_i32_21 = arith.constant 16 : i32
    %c0_i32_22 = arith.constant 0 : i32
    %67 = arith.cmpi eq, %c16_i32_21, %c0_i32_22 : i32
    %c1_i32_23 = arith.constant 1 : i32
    %68 = arith.select %67, %c1_i32_23, %c16_i32_21 : i32
    %69 = vector.broadcast %68 : i32 to vector<32x1xi32>
    %70 = arith.remsi %39, %69 : vector<32x1xi32>
    %c0_i32_24 = arith.constant 0 : i32
    %71 = vector.broadcast %c0_i32_24 : i32 to vector<32x1xi32>
    %72 = arith.cmpi ne, %70, %71 : vector<32x1xi32>
    %c0_i32_25 = arith.constant 0 : i32
    %73 = vector.broadcast %c0_i32_25 : i32 to vector<32x1xi32>
    %74 = arith.cmpi slt, %70, %73 : vector<32x1xi32>
    %c0_i32_26 = arith.constant 0 : i32
    %75 = arith.cmpi slt, %68, %c0_i32_26 : i32
    %76 = vector.broadcast %75 : i1 to vector<32x1xi1>
    %77 = vector.broadcast %76 : vector<32x1xi1> to vector<32x1xi1>
    %78 = arith.xori %74, %77 : vector<32x1xi1>
    %79 = arith.andi %78, %72 : vector<32x1xi1>
    %80 = vector.broadcast %68 : i32 to vector<32x1xi32>
    %81 = arith.addi %70, %80 : vector<32x1xi32>
    %82 = arith.select %79, %81, %70 : vector<32x1xi1>, vector<32x1xi32>
    %c15_i32 = arith.constant 15 : i32
    %83 = vector.broadcast %c15_i32 : i32 to vector<32x1xi32>
    %84 = arith.cmpi eq, %82, %83 : vector<32x1xi32>
    %cst_27 = arith.constant 0.000000e+00 : f32
    %85 = vector.shape_cast %84 : vector<32x1xi1> to vector<32x1xi1>
    %86 = vector.broadcast %85 : vector<32x1xi1> to vector<32x128xi1>
    %87 = vector.broadcast %cst_27 : f32 to vector<32x128xf32>
    %88 = arith.select %86, %87, %66 : vector<32x128xi1>, vector<32x128xf32>
    %c6 = arith.constant 6 : index
    %c0_28 = arith.constant 0 : index
    %89 = vector.load %arg3[%c6, %c0_28] : memref<9x128xf32, #tpu.memory_space<vmem>>, vector<1x128xf32>
    %90 = vector.broadcast %89 : vector<1x128xf32> to vector<32x128xf32>
    %91 = arith.mulf %64, %90 : vector<32x128xf32>
    %c7 = arith.constant 7 : index
    %c0_29 = arith.constant 0 : index
    %92 = vector.load %arg3[%c7, %c0_29] : memref<9x128xf32, #tpu.memory_space<vmem>>, vector<1x128xf32>
    %93 = vector.broadcast %92 : vector<1x128xf32> to vector<32x128xf32>
    %94 = arith.mulf %38, %93 : vector<32x128xf32>
    %95 = arith.addf %91, %94 : vector<32x128xf32>
    %c8 = arith.constant 8 : index
    %c0_30 = arith.constant 0 : index
    %96 = vector.load %arg3[%c8, %c0_30] : memref<9x128xf32, #tpu.memory_space<vmem>>, vector<1x128xf32>
    %97 = vector.broadcast %96 : vector<1x128xf32> to vector<32x128xf32>
    %98 = arith.mulf %88, %97 : vector<32x128xf32>
    %99 = arith.addf %95, %98 : vector<32x128xf32>
    %c3 = arith.constant 3 : index
    %c0_31 = arith.constant 0 : index
    %100 = vector.load %arg3[%c3, %c0_31] : memref<9x128xf32, #tpu.memory_space<vmem>>, vector<1x128xf32>
    %101 = vector.broadcast %100 : vector<1x128xf32> to vector<32x128xf32>
    %102 = arith.addf %99, %101 : vector<32x128xf32>
    %c1_32 = arith.constant 1 : index
    %103 = memref.load %arg5[%c1_32] : memref<2xf32, #tpu.memory_space<smem>>
    %cst_33 = arith.constant 0.000000e+00 : f32
    %104 = vector.broadcast %cst_33 : f32 to vector<32x128xf32>
    %105 = arith.cmpf oge, %102, %104 : vector<32x128xf32>
    %106 = vector.broadcast %103 : f32 to vector<32x128xf32>
    %107 = arith.mulf %106, %102 : vector<32x128xf32>
    %108 = arith.select %105, %102, %107 : vector<32x128xi1>, vector<32x128xf32>
    %c4 = arith.constant 4 : index
    %c0_34 = arith.constant 0 : index
    %109 = vector.load %arg3[%c4, %c0_34] : memref<9x128xf32, #tpu.memory_space<vmem>>, vector<1x128xf32>
    %c5 = arith.constant 5 : index
    %c0_35 = arith.constant 0 : index
    %110 = vector.load %arg3[%c5, %c0_35] : memref<9x128xf32, #tpu.memory_space<vmem>>, vector<1x128xf32>
    %cst_36 = arith.constant dense<0.000000e+00> : vector<32xf32>
    %111 = vector.multi_reduction <add>, %108, %cst_36 [1] : vector<32x128xf32> to vector<32xf32>
    %112 = vector.shape_cast %111 : vector<32xf32> to vector<32x1xf32>
    %113 = arith.mulf %108, %108 : vector<32x128xf32>
    %cst_37 = arith.constant dense<0.000000e+00> : vector<32xf32>
    %114 = vector.multi_reduction <add>, %113, %cst_37 [1] : vector<32x128xf32> to vector<32xf32>
    %115 = vector.shape_cast %114 : vector<32xf32> to vector<32x1xf32>
    %cst_38 = arith.constant 7.812500e-03 : f32
    %116 = vector.broadcast %cst_38 : f32 to vector<32x1xf32>
    %117 = arith.mulf %112, %116 : vector<32x1xf32>
    %cst_39 = arith.constant 7.812500e-03 : f32
    %118 = vector.broadcast %cst_39 : f32 to vector<32x1xf32>
    %119 = arith.mulf %115, %118 : vector<32x1xf32>
    %120 = arith.mulf %117, %117 : vector<32x1xf32>
    %121 = arith.subf %119, %120 : vector<32x1xf32>
    %cst_40 = arith.constant 0.000000e+00 : f32
    %122 = vector.broadcast %cst_40 : f32 to vector<32x1xf32>
    %123 = arith.maximumf %121, %122 : vector<32x1xf32>
    %124 = vector.broadcast %117 : vector<32x1xf32> to vector<32x128xf32>
    %125 = arith.subf %108, %124 : vector<32x128xf32>
    %cst_41 = arith.constant 9.99999974E-6 : f32
    %126 = vector.broadcast %cst_41 : f32 to vector<32x1xf32>
    %127 = arith.addf %123, %126 : vector<32x1xf32>
    %128 = math.rsqrt %127 : vector<32x1xf32>
    %129 = vector.broadcast %128 : vector<32x1xf32> to vector<32x128xf32>
    %130 = arith.mulf %125, %129 : vector<32x128xf32>
    %131 = vector.broadcast %109 : vector<1x128xf32> to vector<32x128xf32>
    %132 = arith.mulf %130, %131 : vector<32x128xf32>
    %133 = vector.broadcast %110 : vector<1x128xf32> to vector<32x128xf32>
    %134 = arith.addf %132, %133 : vector<32x128xf32>
    %135 = arith.truncf %134 : vector<32x128xf32> to vector<32x128xbf16>
    %c0_42 = arith.constant 0 : index
    %c0_43 = arith.constant 0 : index
    %136 = vector.load %arg2[%c0_42, %c0_43] : memref<128x64xbf16, #tpu.memory_space<vmem>>, vector<128x64xbf16>
    %cst_44 = arith.constant dense<0.000000e+00> : vector<32x64xf32>
    %137 = tpu.matmul %135, %136, %cst_44 {dimension_numbers = #tpu.dot_dimension_numbers<[1], [0], [0], [1], [0, 0, 1, 1], [], []>} : vector<32x128xbf16>, vector<128x64xbf16>, vector<32x64xf32> -> vector<32x64xf32>
    %c0_45 = arith.constant 0 : index
    %c0_46 = arith.constant 0 : index
    %138 = vector.load %arg4[%c0_45, %c0_46] : memref<1x64xf32, #tpu.memory_space<vmem>>, vector<1x64xf32>
    %139 = vector.broadcast %138 : vector<1x64xf32> to vector<32x64xf32>
    %140 = arith.addf %137, %139 : vector<32x64xf32>
    %141 = arith.addf %0, %140 : vector<32x64xf32>
    %c0_47 = arith.constant 0 : index
    %c0_48 = arith.constant 0 : index
    %142 = vector.load %arg6[%c0_47, %c0_48] : memref<32x64xf32, #tpu.memory_space<vmem>>, vector<32x64xf32>
    tpu.vector_store %arg6[%c0_47, %c0_48], %141 {strides = array<i32>} : memref<32x64xf32, #tpu.memory_space<vmem>>, vector<32x64xf32>,
    return
  }
}

</mosaic_0001>

<llo_original>
// kernel: conv1d_block.1
$region0: #{conv1d_block.1}
  #allocation0 [shape = 'u32[]', space=smem, size = 0x4, offset = 0x4, fixed_abs, tag = 'smem constant byte address 0x4 - core index']
  #allocation1 [shape = 'u32[144,128]{1,0:T(1,128)}', space=vmem, size = 0x12000, scoped, tag = 'internal scratch']
  %s0 = inlined_call_operand.vmem [shape: f32[32,64], index: 0, kind: input, shape index: {}]
  %s1 = inlined_call_operand.vmem [shape: bf16[64,128], index: 1, kind: input, shape index: {}]
  %s2 = inlined_call_operand.vmem [shape: bf16[128,64], index: 2, kind: input, shape index: {}]
  %s3 = inlined_call_operand.vmem [shape: f32[9,128], index: 3, kind: input, shape index: {}]
  %s4 = inlined_call_operand.vmem [shape: f32[1,64], index: 4, kind: input, shape index: {}]
  %s5 = inlined_call_operand.vmem [shape: f32[2], index: 5, kind: input, shape index: {}]
  %s6 = inlined_call_operand.hbm [shape: f32[32,64], index: 6, kind: output, shape index: {}]
  %s7 = sld [smem:[#allocation0]]
  $region38: #{conv1d_block.1} parent=0
    _
  %s9 = ssub.s32 1, %s7
  %s10 = scalar_select 0, %s9, %s7
  $region1: #{conv1d_block.1} parent=0
    #allocation2 [shape = 'u8[512]{0}', space=smem, size = 0x200, scoped, tag = 'input window, operand 5, single buffered']
    #allocation3 [shape = 's32[1]{0}', space=sflag, size = 0x4, scoped, tag = 'scoped memory for conv1d_block.1']
    #allocation4 [shape = 's32[1]{0}', space=sflag, size = 0x4, scoped, tag = 'scoped memory for conv1d_block.1']
    #allocation5 [shape = 'u8[16384]{0}', space=vmem, size = 0x4000, scoped, tag = 'output window, operand 0, single buffered']
    %11 = vsyncpa [#allocation4], 0
    %12 = vsyncpa [#allocation3], 0
    // Predicated region
    $region2: #{conv1d_block.1} parent=1 // pred_check
      _
    $region3: #{conv1d_block.1} parent=1 // pred_check_branch
      %14 = sbr.rel (0) target = $region5
    $region4: #{conv1d_block.1} parent=1 // pred_region
      _
    $region5: #{conv1d_block.1} parent=1 // pred_fallthru
      _
    // Predicated region
    $region6: #{conv1d_block.1} parent=1 // pred_check
      _
    $region7: #{conv1d_block.1} parent=1 // pred_check_branch
      %16 = sbr.rel (0) target = $region9
    $region8: #{conv1d_block.1} parent=1 // pred_region
      _
    $region9: #{conv1d_block.1} parent=1 // pred_fallthru
      _
    // Predicated region
    $region10: #{conv1d_block.1} parent=1 // pred_check
      _
    $region11: #{conv1d_block.1} parent=1 // pred_check_branch
      %18 = sbr.rel (0) target = $region13
    $region12: #{conv1d_block.1} parent=1 // pred_region
      _
    $region13: #{conv1d_block.1} parent=1 // pred_fallthru
      _
    // Predicated region
    $region14: #{conv1d_block.1} parent=1 // pred_check
      _
    $region15: #{conv1d_block.1} parent=1 // pred_check_branch
      %20 = sbr.rel (0) target = $region17
    $region16: #{conv1d_block.1} parent=1 // pred_region
      _
    $region17: #{conv1d_block.1} parent=1 // pred_fallthru
      _
    // Predicated region
    $region18: #{conv1d_block.1} parent=1 // pred_check
      _
    $region19: #{conv1d_block.1} parent=1 // pred_check_branch
      %22 = sbr.rel (0) target = $region21
    $region20: #{conv1d_block.1} parent=1 // pred_region
      _
    $region21: #{conv1d_block.1} parent=1 // pred_fallthru
      _
    // Predicated region
    $region22: #{conv1d_block.1} parent=1 // pred_check
      _
    $region23: #{conv1d_block.1} parent=1 // pred_check_branch
      %24 = sbr.rel (0) target = $region25
    $region24: #{conv1d_block.1} parent=1 // pred_region
      %s26 = ssub.s32 16, 16
      %27 = vsyncadd [#allocation4], %s26
      %s29 = sshll.u32 %s5, 4
      %s30 = int_to_ptr.vmem [resolvable:$true] %s29
      %32 = dma.vmem_to_smem %s30, 16, [#allocation2], [#allocation4]
    $region25: #{conv1d_block.1} parent=1 // pred_fallthru
      _
    // Predicated region
    $region26: #{conv1d_block.1} parent=1 // pred_check
      _
    $region27: #{conv1d_block.1} parent=1 // pred_check_branch
      %34 = sbr.rel (0) target = $region29
    $region28: #{conv1d_block.1} parent=1 // pred_region
      %35 = dma.done [#allocation4], 16
    $region29: #{conv1d_block.1} parent=1 // pred_fallthru
      _
    %36 = sfence
    %v38 = vld [vmem:[%s0] sm:$0xff]
    %v39 = vld [vmem:[%s0 + $0x8] sm:$0xff]
    %v40 = vld [vmem:[%s0 + $0x10] sm:$0xff]
    %v41 = vld [vmem:[%s0 + $0x18] sm:$0xff]
    %v42 = vpack.c.bf16 %v39, %v38
    %v43 = vpack.c.bf16 %v41, %v40
    %v44 = vld [vmem:[%s1] sm:$0xf]
    %v45 = vld [vmem:[%s1 + $0x4] sm:$0xf]
    %v46 = vld [vmem:[%s1 + $0x8] sm:$0xf]
    %v47 = vld [vmem:[%s1 + $0xc] sm:$0xf]
    %v48 = vld [vmem:[%s1 + $0x10] sm:$0xf]
    %v49 = vld [vmem:[%s1 + $0x14] sm:$0xf]
    %v50 = vld [vmem:[%s1 + $0x18] sm:$0xf]
    %v51 = vld [vmem:[%s1 + $0x1c] sm:$0xf]
    %v52 = vld [vmem:[%s3] sm:$0x1]
    %v53 = vlaneseq
    %v54 = vshrl.u32 %v53, 7
    %v55 = vsub.s32 0, %v54
    %v56 = vrot.slane %v52, %v55
    %v65 = vunpack.c.l.b16 %v44
    %v66 = vunpack.c.l.b16 %v45
    %v67 = vunpack.c.l.b16 %v46
    %v68 = vunpack.c.l.b16 %v47
    %v69 = vunpack.c.l.b16 %v48
    %v70 = vunpack.c.l.b16 %v49
    %v71 = vunpack.c.l.b16 %v50
    %v72 = vunpack.c.l.b16 %v51
    %v73 = vpack.c.b16 %v66, %v65
    %v74 = vpack.c.b16 %v68, %v67
    %v75 = vpack.c.b16 %v70, %v69
    %v76 = vpack.c.b16 %v72, %v71
    %vm81 = vcmask 523264
    %v83 = vsel %vm81, %v42, 0
    %v86 = vsel %vm81, %v43, 0
    %88 = vmatprep.subr.bf16.mxu0 0
    %89 = vmatpush1.bf16.msra.mxu0 0
    %90 = vmatprep.subr.bf16.mxu0 0
    %91 = vmatpush1.bf16.msra.mxu0 0
    %92 = vmatprep.subr.bf16.mxu0 0
    %93 = vmatpush1.bf16.msra.mxu0 0
    %94 = vmatprep.subr.bf16.mxu0 0
    %95 = vmatpush1.bf16.msra.mxu0 0
    %96 = vmatprep.subr.bf16.mxu0 0
    %97 = vmatpush1.bf16.msra.mxu0 %v76
    %98 = vmatprep.subr.bf16.mxu0 0
    %99 = vmatpush1.bf16.msra.mxu0 %v75
    %100 = vmatprep.subr.bf16.mxu0 0
    %101 = vmatpush1.bf16.msra.mxu0 %v74
    %102 = vmatprep.subr.bf16.mxu0 0
    %103 = vmatpush1.bf16.msra.mxu0 %v73
    %104 = vmatprep.subr.bf16.mxu0 0
    %105 = vmatpush2.bf16.msra.mxu0 0
    %106 = vmatprep.subr.bf16.mxu0 0
    %107 = vmatpush2.bf16.msra.mxu0 0
    %108 = vmatprep.subr.bf16.mxu0 0
    %109 = vmatpush2.bf16.msra.mxu0 0
    %110 = vmatprep.subr.bf16.mxu0 0
    %111 = vmatpush2.bf16.msra.mxu0 0
    %112 = vmatprep.subr.bf16.mxu0 0
    %113 = vmatpush2.bf16.msra.mxu0 0
    %114 = vmatprep.subr.bf16.mxu0 0
    %115 = vmatpush2.bf16.msra.mxu0 0
    %116 = vmatprep.subr.bf16.mxu0 0
    %117 = vmatpush2.bf16.msra.mxu0 0
    %118 = vmatprep.subr.bf16.mxu0 0
    %119 = vmatpush2.bf16.msra.mxu0 0
    %120 = vmatprep.mubr.bf16.mxu0 0
    %121 = vmatmul.mubr.bf16.gmra.mxu0 %v83
    %v122 = vpop.f32.mrf.mxu0
    %v123 = vadd.f32 %v56, %v122
    %v124 = vpop.f32.mrf.mxu0
    %v125 = vpop.f32.mrf.mxu0
    %v126 = vadd.f32 %v56, %v125
    %v127 = vpop.f32.mrf.mxu0
    %128 = vmatprep.mubr.bf16.mxu0 0
    %129 = vmatmul.mubr.bf16.gmra.mxu0 %v86
    %v130 = vpop.f32.mrf.mxu0
    %v131 = vadd.f32 %v56, %v130
    %v132 = vpop.f32.mrf.mxu0
    %v133 = vpop.f32.mrf.mxu0
    %v134 = vadd.f32 %v56, %v133
    %v135 = vpop.f32.mrf.mxu0
    %136 = vdwg.mxu0
    %s137 = sld [smem:[#allocation2]]
    %vm138 = vcmp.ge.f32.partialorder %v123, 0.0
    %vm139 = vcmp.ge.f32.partialorder %v126, 0.0
    %vm140 = vcmp.ge.f32.partialorder %v131, 0.0
    %vm141 = vcmp.ge.f32.partialorder %v134, 0.0
    %v142 = vstv %s137
    %v143 = vmul.f32 %v142, %v123
    %v144 = vmul.f32 %v142, %v126
    %v145 = vmul.f32 %v142, %v131
    %v146 = vmul.f32 %v142, %v134
    %v147 = vsel %vm138, %v123, %v143
    %v148 = vsel %vm139, %v126, %v144
    %v149 = vsel %vm140, %v131, %v145
    %v150 = vsel %vm141, %v134, %v146
    %v151 = vld [vmem:[%s3 + $0x1] sm:$0x1]
    %v152 = vld [vmem:[%s3 + $0x2] sm:$0x1]
    %153 = vadd.xlane.f32.xlu0 %v147
    %v154 = vpop.xlane.xlu0 %153
    %155 = vadd.xlane.f32.xlu0 %v148
    %v156 = vpop.xlane.xlu0 %155
    %157 = vadd.xlane.f32.xlu0 %v149
    %v158 = vpop.xlane.xlu0 %157
    %159 = vadd.xlane.f32.xlu0 %v150
    %v160 = vpop.xlane.xlu0 %159
    %v161 = vmul.f32 %v147, %v147
    %v162 = vmul.f32 %v148, %v148
    %v163 = vmul.f32 %v149, %v149
    %v164 = vmul.f32 %v150, %v150
    %165 = vadd.xlane.f32.xlu0 %v161
    %v166 = vpop.xlane.xlu0 %165
    %167 = vadd.xlane.f32.xlu0 %v162
    %v168 = vpop.xlane.xlu0 %167
    %169 = vadd.xlane.f32.xlu0 %v163
    %v170 = vpop.xlane.xlu0 %169
    %171 = vadd.xlane.f32.xlu0 %v164
    %v172 = vpop.xlane.xlu0 %171
    %v173 = vmul.f32 %v154, 0.0078125
    %v174 = vmul.f32 %v156, 0.0078125
    %v175 = vmul.f32 %v158, 0.0078125
    %v176 = vmul.f32 %v160, 0.0078125
    %v177 = vmul.f32 %v166, 0.0078125
    %v178 = vmul.f32 %v168, 0.0078125
    %v179 = vmul.f32 %v170, 0.0078125
    %v180 = vmul.f32 %v172, 0.0078125
    %v181 = vmul.f32 %v173, %v173
    %v182 = vmul.f32 %v174, %v174
    %v183 = vmul.f32 %v175, %v175
    %v184 = vmul.f32 %v176, %v176
    %v185 = vsub.f32 %v177, %v181
    %v186 = vsub.f32 %v178, %v182
    %v187 = vsub.f32 %v179, %v183
    %v188 = vsub.f32 %v180, %v184
    %v189 = vmax.f32 %v185, 0.0
    %v190 = vmax.f32 %v186, 0.0
    %v191 = vmax.f32 %v187, 0.0
    %v192 = vmax.f32 %v188, 0.0
    %v193 = vsub.f32 %v147, %v173
    %v194 = vsub.f32 %v148, %v174
    %v195 = vsub.f32 %v149, %v175
    %v196 = vsub.f32 %v150, %v176
    %v197 = vadd.f32 %v189, 1e-05
    %v198 = vadd.f32 %v190, 1e-05
    %v199 = vadd.f32 %v191, 1e-05
    %v200 = vadd.f32 %v192, 1e-05
    %v201 = vrsqrt.pop %v197
    %v202 = vrsqrt.pop %v198
    %v203 = vrsqrt.pop %v199
    %v204 = vrsqrt.pop %v200
    %v205 = vmul.f32 %v193, %v201
    %v206 = vmul.f32 %v194, %v202
    %v207 = vmul.f32 %v195, %v203
    %v208 = vmul.f32 %v196, %v204
    %v209 = vlaneseq
    %v210 = vshrl.u32 %v209, 7
    %v211 = vsub.s32 0, %v210
    %v212 = vrot.slane %v151, %v211
    %v213 = vmul.f32 %v205, %v212
    %v214 = vmul.f32 %v206, %v212
    %v215 = vmul.f32 %v207, %v212
    %v216 = vmul.f32 %v208, %v212
    %v217 = vlaneseq
    %v218 = vshrl.u32 %v217, 7
    %v219 = vsub.s32 0, %v218
    %v220 = vrot.slane %v152, %v219
    %v221 = vadd.f32 %v213, %v220
    %v222 = vadd.f32 %v214, %v220
    %v223 = vadd.f32 %v215, %v220
    %v224 = vadd.f32 %v216, %v220
    %v225 = vlaneseq
    %v226 = vshrl.u32 %v225, 7
    %v227 = vadd.s32 %v226, 8
    %v228 = vadd.s32 %v226, 16
    %v229 = vadd.s32 %v226, 24
    %vm234 = vcmask 1040384
    %v235 = vrot.slane %v221, 7
    %v236 = vrot.slane %v222, 7
    %v237 = vsel %vm234, %v235, %v236
    %v238 = vrot.slane %v223, 7
    %v239 = vsel %vm234, %v236, %v238
    %v240 = vrot.slane %v224, 7
    %v241 = vsel %vm234, %v238, %v240
    %v246 = vsel %vm234, 0.0, %v235
    %vm247 = vcmp.lt.s32.totalorder %v226, 0
    %v248 = vsub.s32 0, %v226
    %v249 = vsel %vm247, %v248, %v226
    %v250 = vshrl.u32 %v249, 4
    %v251 = vand.u32 %v249, 15
    %v252 = vsub.s32 0, %v251
    %v253 = vsel %vm247, %v252, %v251
    %vm254 = vcmp.lt.s32.totalorder %v227, 0
    %v255 = vsub.s32 0, %v227
    %v256 = vsel %vm254, %v255, %v227
    %v257 = vshrl.u32 %v256, 4
    %v258 = vand.u32 %v256, 15
    %v259 = vsub.s32 0, %v258
    %v260 = vsel %vm254, %v259, %v258
    %vm261 = vcmp.lt.s32.totalorder %v228, 0
    %v262 = vsub.s32 0, %v228
    %v263 = vsel %vm261, %v262, %v228
    %v264 = vshrl.u32 %v263, 4
    %v265 = vand.u32 %v263, 15
    %v266 = vsub.s32 0, %v265
    %v267 = vsel %vm261, %v266, %v265
    %vm268 = vcmp.lt.s32.totalorder %v229, 0
    %v269 = vsub.s32 0, %v229
    %v270 = vsel %vm268, %v269, %v229
    %v271 = vshrl.u32 %v270, 4
    %v272 = vand.u32 %v270, 15
    %v273 = vsub.s32 0, %v272
    %v274 = vsel %vm268, %v273, %v272
    %vm275 = vcmp.ne.s32.totalorder %v253, 0
    %vm276 = vcmp.ne.s32.totalorder %v260, 0
    %vm277 = vcmp.ne.s32.totalorder %v267, 0
    %vm278 = vcmp.ne.s32.totalorder %v274, 0
    %vm279 = vcmp.lt.s32.totalorder %v253, 0
    %vm280 = vcmp.lt.s32.totalorder %v260, 0
    %vm281 = vcmp.lt.s32.totalorder %v267, 0
    %vm282 = vcmp.lt.s32.totalorder %v274, 0
    %vm283 = vmand %vm279, %vm275
    %vm284 = vmand %vm280, %vm276
    %vm285 = vmand %vm281, %vm277
    %vm286 = vmand %vm282, %vm278
    %v287 = vadd.s32 %v253, 16
    %v288 = vadd.s32 %v260, 16
    %v289 = vadd.s32 %v267, 16
    %v290 = vadd.s32 %v274, 16
    %v291 = vsel %vm283, %v287, %v253
    %v292 = vsel %vm284, %v288, %v260
    %v293 = vsel %vm285, %v289, %v267
    %v294 = vsel %vm286, %v290, %v274
    %vm295 = vcmp.eq.s32.totalorder %v291, 0
    %vm296 = vcmp.eq.s32.totalorder %v292, 0
    %vm297 = vcmp.eq.s32.totalorder %v293, 0
    %vm298 = vcmp.eq.s32.totalorder %v294, 0
    %v299 = vsel %vm295, 1, 0
    %v300 = vsel %vm296, 1, 0
    %v301 = vsel %vm297, 1, 0
    %v302 = vsel %vm298, 1, 0
    %vm303 = vcmp.eq.s32.totalorder %v299, 1
    %vm304 = vcmp.eq.s32.totalorder %v300, 1
    %vm305 = vcmp.eq.s32.totalorder %v301, 1
    %vm306 = vcmp.eq.s32.totalorder %v302, 1
    %v307 = vsel %vm303, 0.0, %v246
    %v308 = vsel %vm304, 0.0, %v237
    %v309 = vsel %vm305, 0.0, %v239
    %v310 = vsel %vm306, 0.0, %v241
    %vm311 = vcmask 1046528
    %v312 = vrot.slane %v221, 1
    %v313 = vrot.slane %v222, 1
    %v314 = vsel %vm311, %v312, %v313
    %v315 = vrot.slane %v223, 1
    %v316 = vsel %vm311, %v313, %v315
    %v317 = vrot.slane %v224, 1
    %v318 = vsel %vm311, %v315, %v317
    %v323 = vsel %vm311, %v317, 0.0
    %vm324 = vcmp.eq.s32.totalorder %v291, 15
    %vm325 = vcmp.eq.s32.totalorder %v292, 15
    %vm326 = vcmp.eq.s32.totalorder %v293, 15
    %vm327 = vcmp.eq.s32.totalorder %v294, 15
    %v328 = vsel %vm324, 1, 0
    %v329 = vsel %vm325, 1, 0
    %v330 = vsel %vm326, 1, 0
    %v331 = vsel %vm327, 1, 0
    %vm332 = vcmp.eq.s32.totalorder %v328, 1
    %vm333 = vcmp.eq.s32.totalorder %v329, 1
    %vm334 = vcmp.eq.s32.totalorder %v330, 1
    %vm335 = vcmp.eq.s32.totalorder %v331, 1
    %v336 = vsel %vm332, 0.0, %v314
    %v337 = vsel %vm333, 0.0, %v316
    %v338 = vsel %vm334, 0.0, %v318
    %v339 = vsel %vm335, 0.0, %v323
    %v340 = vld [vmem:[%s3 + $0x6] sm:$0x1]
    %v341 = vlaneseq
    %v342 = vshrl.u32 %v341, 7
    %v343 = vsub.s32 0, %v342
    %v344 = vrot.slane %v340, %v343
    %v345 = vmul.f32 %v307, %v344
    %v346 = vmul.f32 %v308, %v344
    %v347 = vmul.f32 %v309, %v344
    %v348 = vmul.f32 %v310, %v344
    %v349 = vld [vmem:[%s3 + $0x7] sm:$0x1]
    %v350 = vlaneseq
    %v351 = vshrl.u32 %v350, 7
    %v352 = vsub.s32 0, %v351
    %v353 = vrot.slane %v349, %v352
    %v354 = vmul.f32 %v221, %v353
    %v355 = vmul.f32 %v222, %v353
    %v356 = vmul.f32 %v223, %v353
    %v357 = vmul.f32 %v224, %v353
    %v358 = vadd.f32 %v345, %v354
    %v359 = vadd.f32 %v346, %v355
    %v360 = vadd.f32 %v347, %v356
    %v361 = vadd.f32 %v348, %v357
    %v362 = vld [vmem:[%s3 + $0x8] sm:$0x1]
    %v363 = vlaneseq
    %v364 = vshrl.u32 %v363, 7
    %v365 = vsub.s32 0, %v364
    %v366 = vrot.slane %v362, %v365
    %v367 = vmul.f32 %v336, %v366
    %v368 = vmul.f32 %v337, %v366
    %v369 = vmul.f32 %v338, %v366
    %v370 = vmul.f32 %v339, %v366
    %v371 = vadd.f32 %v358, %v367
    %v372 = vadd.f32 %v359, %v368
    %v373 = vadd.f32 %v360, %v369
    %v374 = vadd.f32 %v361, %v370
    %v375 = vld [vmem:[%s3 + $0x3] sm:$0x1]
    %v376 = vlaneseq
    %v377 = vshrl.u32 %v376, 7
    %v378 = vsub.s32 0, %v377
    %v379 = vrot.slane %v375, %v378
    %v380 = vadd.f32 %v371, %v379
    %v381 = vadd.f32 %v372, %v379
    %v382 = vadd.f32 %v373, %v379
    %v383 = vadd.f32 %v374, %v379
    %s384 = sld [smem:[#allocation2 + $0x1]]
    %vm385 = vcmp.ge.f32.partialorder %v380, 0.0
    %vm386 = vcmp.ge.f32.partialorder %v381, 0.0
    %vm387 = vcmp.ge.f32.partialorder %v382, 0.0
    %vm388 = vcmp.ge.f32.partialorder %v383, 0.0
    %v389 = vstv %s384
    %v390 = vmul.f32 %v389, %v380
    %v391 = vmul.f32 %v389, %v381
    %v392 = vmul.f32 %v389, %v382
    %v393 = vmul.f32 %v389, %v383
    %v394 = vsel %vm385, %v380, %v390
    %v395 = vsel %vm386, %v381, %v391
    %v396 = vsel %vm387, %v382, %v392
    %v397 = vsel %vm388, %v383, %v393
    %v398 = vld [vmem:[%s3 + $0x4] sm:$0x1]
    %v399 = vld [vmem:[%s3 + $0x5] sm:$0x1]
    %400 = vadd.xlane.f32.xlu0 %v394
    %v401 = vpop.xlane.xlu0 %400
    %402 = vadd.xlane.f32.xlu0 %v395
    %v403 = vpop.xlane.xlu0 %402
    %404 = vadd.xlane.f32.xlu0 %v396
    %v405 = vpop.xlane.xlu0 %404
    %406 = vadd.xlane.f32.xlu0 %v397
    %v407 = vpop.xlane.xlu0 %406
    %v408 = vmul.f32 %v394, %v394
    %v409 = vmul.f32 %v395, %v395
    %v410 = vmul.f32 %v396, %v396
    %v411 = vmul.f32 %v397, %v397
    %412 = vadd.xlane.f32.xlu0 %v408
    %v413 = vpop.xlane.xlu0 %412
    %414 = vadd.xlane.f32.xlu0 %v409
    %v415 = vpop.xlane.xlu0 %414
    %416 = vadd.xlane.f32.xlu0 %v410
    %v417 = vpop.xlane.xlu0 %416
    %418 = vadd.xlane.f32.xlu0 %v411
    %v419 = vpop.xlane.xlu0 %418
    %v420 = vmul.f32 %v401, 0.0078125
    %v421 = vmul.f32 %v403, 0.0078125
    %v422 = vmul.f32 %v405, 0.0078125
    %v423 = vmul.f32 %v407, 0.0078125
    %v424 = vmul.f32 %v413, 0.0078125
    %v425 = vmul.f32 %v415, 0.0078125
    %v426 = vmul.f32 %v417, 0.0078125
    %v427 = vmul.f32 %v419, 0.0078125
    %v428 = vmul.f32 %v420, %v420
    %v429 = vmul.f32 %v421, %v421
    %v430 = vmul.f32 %v422, %v422
    %v431 = vmul.f32 %v423, %v423
    %v432 = vsub.f32 %v424, %v428
    %v433 = vsub.f32 %v425, %v429
    %v434 = vsub.f32 %v426, %v430
    %v435 = vsub.f32 %v427, %v431
    %v436 = vmax.f32 %v432, 0.0
    %v437 = vmax.f32 %v433, 0.0
    %v438 = vmax.f32 %v434, 0.0
    %v439 = vmax.f32 %v435, 0.0
    %v440 = vsub.f32 %v394, %v420
    %v441 = vsub.f32 %v395, %v421
    %v442 = vsub.f32 %v396, %v422
    %v443 = vsub.f32 %v397, %v423
    %v444 = vadd.f32 %v436, 1e-05
    %v445 = vadd.f32 %v437, 1e-05
    %v446 = vadd.f32 %v438, 1e-05
    %v447 = vadd.f32 %v439, 1e-05
    %v448 = vrsqrt.pop %v444
    %v449 = vrsqrt.pop %v445
    %v450 = vrsqrt.pop %v446
    %v451 = vrsqrt.pop %v447
    %v452 = vmul.f32 %v440, %v448
    %v453 = vmul.f32 %v441, %v449
    %v454 = vmul.f32 %v442, %v450
    %v455 = vmul.f32 %v443, %v451
    %v456 = vlaneseq
    %v457 = vshrl.u32 %v456, 7
    %v458 = vsub.s32 0, %v457
    %v459 = vrot.slane %v398, %v458
    %v460 = vmul.f32 %v452, %v459
    %v461 = vmul.f32 %v453, %v459
    %v462 = vmul.f32 %v454, %v459
    %v463 = vmul.f32 %v455, %v459
    %v464 = vlaneseq
    %v465 = vshrl.u32 %v464, 7
    %v466 = vsub.s32 0, %v465
    %v467 = vrot.slane %v399, %v466
    %v468 = vadd.f32 %v460, %v467
    %v469 = vadd.f32 %v461, %v467
    %v470 = vadd.f32 %v462, %v467
    %v471 = vadd.f32 %v463, %v467
    %v472 = vpack.c.bf16 %v469, %v468
    %v473 = vpack.c.bf16 %v471, %v470
    %v474 = vld [vmem:[%s2] sm:$0xf]
    %v475 = vld [vmem:[%s2 + $0x4] sm:$0xf]
    %v476 = vld [vmem:[%s2 + $0x8] sm:$0xf]
    %v477 = vld [vmem:[%s2 + $0xc] sm:$0xf]
    %v478 = vld [vmem:[%s2 + $0x10] sm:$0xf]
    %v479 = vld [vmem:[%s2 + $0x14] sm:$0xf]
    %v480 = vld [vmem:[%s2 + $0x18] sm:$0xf]
    %v481 = vld [vmem:[%s2 + $0x1c] sm:$0xf]
    %v482 = vld [vmem:[%s2 + $0x20] sm:$0xf]
    %v483 = vld [vmem:[%s2 + $0x24] sm:$0xf]
    %v484 = vld [vmem:[%s2 + $0x28] sm:$0xf]
    %v485 = vld [vmem:[%s2 + $0x2c] sm:$0xf]
    %v486 = vld [vmem:[%s2 + $0x30] sm:$0xf]
    %v487 = vld [vmem:[%s2 + $0x34] sm:$0xf]
    %v488 = vld [vmem:[%s2 + $0x38] sm:$0xf]
    %v489 = vld [vmem:[%s2 + $0x3c] sm:$0xf]
    %v490 = vld [vmem:[%s4] sm:$0x1]
    %v492 = vlaneseq
    %v493 = vshrl.u32 %v492, 7
    %v494 = vsub.s32 0, %v493
    %v495 = vrot.slane %v490, %v494
    %v513 = vunpack.c.l.b16 %v474
    %v514 = vunpack.c.l.b16 %v475
    %v515 = vunpack.c.l.b16 %v476
    %v516 = vunpack.c.l.b16 %v477
    %v517 = vunpack.c.l.b16 %v478
    %v518 = vunpack.c.l.b16 %v479
    %v519 = vunpack.c.l.b16 %v480
    %v520 = vunpack.c.l.b16 %v481
    %v521 = vunpack.c.l.b16 %v482
    %v522 = vunpack.c.l.b16 %v483
    %v523 = vunpack.c.l.b16 %v484
    %v524 = vunpack.c.l.b16 %v485
    %v525 = vunpack.c.l.b16 %v486
    %v526 = vunpack.c.l.b16 %v487
    %v527 = vunpack.c.l.b16 %v488
    %v528 = vunpack.c.l.b16 %v489
    %v529 = vpack.c.b16 %v514, %v513
    %v530 = vpack.c.b16 %v516, %v515
    %v531 = vpack.c.b16 %v518, %v517
    %v532 = vpack.c.b16 %v520, %v519
    %v533 = vpack.c.b16 %v522, %v521
    %v534 = vpack.c.b16 %v524, %v523
    %v535 = vpack.c.b16 %v526, %v525
    %v536 = vpack.c.b16 %v528, %v527
    %545 = vmatprep.subr.bf16.mxu0 0
    %546 = vmatpush1.bf16.msra.mxu0 %v536
    %547 = vmatprep.subr.bf16.mxu0 0
    %548 = vmatpush1.bf16.msra.mxu0 %v535
    %549 = vmatprep.subr.bf16.mxu0 0
    %550 = vmatpush1.bf16.msra.mxu0 %v534
    %551 = vmatprep.subr.bf16.mxu0 0
    %552 = vmatpush1.bf16.msra.mxu0 %v533
    %553 = vmatprep.subr.bf16.mxu0 0
    %554 = vmatpush1.bf16.msra.mxu0 %v532
    %555 = vmatprep.subr.bf16.mxu0 0
    %556 = vmatpush1.bf16.msra.mxu0 %v531
    %557 = vmatprep.subr.bf16.mxu0 0
    %558 = vmatpush1.bf16.msra.mxu0 %v530
    %559 = vmatprep.subr.bf16.mxu0 0
    %560 = vmatpush1.bf16.msra.mxu0 %v529
    %561 = vmatprep.subr.bf16.mxu0 0
    %562 = vmatpush2.bf16.msra.mxu0 0
    %563 = vmatprep.subr.bf16.mxu0 0
    %564 = vmatpush2.bf16.msra.mxu0 0
    %565 = vmatprep.subr.bf16.mxu0 0
    %566 = vmatpush2.bf16.msra.mxu0 0
    %567 = vmatprep.subr.bf16.mxu0 0
    %568 = vmatpush2.bf16.msra.mxu0 0
    %569 = vmatprep.subr.bf16.mxu0 0
    %570 = vmatpush2.bf16.msra.mxu0 0
    %571 = vmatprep.subr.bf16.mxu0 0
    %572 = vmatpush2.bf16.msra.mxu0 0
    %573 = vmatprep.subr.bf16.mxu0 0
    %574 = vmatpush2.bf16.msra.mxu0 0
    %575 = vmatprep.subr.bf16.mxu0 0
    %576 = vmatpush2.bf16.msra.mxu0 0
    %577 = vmatprep.mubr.bf16.mxu0 0
    %578 = vmatmul.mubr.bf16.gmra.mxu0 %v472
    %v579 = vpop.f32.mrf.mxu0
    %v580 = vadd.f32 %v495, %v579
    %v581 = vpop.f32.mrf.mxu0
    %v582 = vpop.f32.mrf.mxu0
    %v583 = vadd.f32 %v495, %v582
    %v584 = vpop.f32.mrf.mxu0
    %585 = vmatprep.mubr.bf16.mxu0 0
    %586 = vmatmul.mubr.bf16.gmra.mxu0 %v473
    %v587 = vpop.f32.mrf.mxu0
    %v588 = vadd.f32 %v495, %v587
    %v589 = vpop.f32.mrf.mxu0
    %v590 = vpop.f32.mrf.mxu0
    %v591 = vadd.f32 %v495, %v590
    %v592 = vpop.f32.mrf.mxu0
    %593 = vdwg.mxu0
    %v594 = vadd.f32 %v38, %v580
    %v595 = vadd.f32 %v39, %v583
    %v596 = vadd.f32 %v40, %v588
    %v597 = vadd.f32 %v41, %v591
    %598 = vst.msk [vmem:[#allocation5] sm:$0xff] %vm81, %v594
    %599 = vst.msk [vmem:[#allocation5 + $0x8] sm:$0xff] %vm81, %v595
    %600 = vst.msk [vmem:[#allocation5 + $0x10] sm:$0xff] %vm81, %v596
    %601 = vst.msk [vmem:[#allocation5 + $0x18] sm:$0xff] %vm81, %v597
    // Predicated region
    $region30: #{conv1d_block.1} parent=1 // pred_check
      _
    $region31: #{conv1d_block.1} parent=1 // pred_check_branch
      %603 = sbr.rel (0) target = $region33
    $region32: #{conv1d_block.1} parent=1 // pred_region
      %s605 = ssub.s32 512, 512
      %606 = vsyncadd [#allocation3], %s605
      %s607 = sshll.u32 [#allocation5], 4
      %s608 = int_to_ptr.vmem [resolvable:$true] %s607
      %613 = dma.vmem_to_hbm [thread:$0]  %s608, 512, %s6, [#allocation3], 128, 128, 8
    $region33: #{conv1d_block.1} parent=1 // pred_fallthru
      _
    // Predicated region
    $region34: #{conv1d_block.1} parent=1 // pred_check
      _
    $region35: #{conv1d_block.1} parent=1 // pred_check_branch
      %615 = sbr.rel (0) target = $region37
    $region36: #{conv1d_block.1} parent=1 // pred_region
      %616 = dma.done [#allocation3], 512
    $region37: #{conv1d_block.1} parent=1 // pred_fallthru
      _
    %617 = vsyncpa [#allocation3], 1
    %618 = vsyncpa [#allocation4], 1

</llo_original>
